<compile_context>
chip_gen: v7x
topology: tpu7x:2x2x1
jax: 0.10.0
libtpu: 0.0.40
codegen_flags: <defaults>
</compile_context>

<pallas_src>
import jax
import jax.numpy as jnp
from jax import lax
from jax.experimental import pallas as pl
from jax.experimental.pallas import tpu as pltpu

LN_EPS = 1e-5


def _round_up(x, m):
    return ((x + m - 1) // m) * m


def _downsample_kernel(x_ref, w_ref, b_ref, o_ref):
    """Fused per-pixel LayerNorm (affine folded into w/b) + 2x2 stride-2 conv.

    x_ref: (tr, 2, Wo, 2*C)  NHWC row pairs; axis1 = kh, lanes = [kw=0 C | kw=1 C]
    w_ref: (4*C, Cout_p)     gamma-folded conv weight, rows ordered (kh, kw, c)
    b_ref: (1, Cout_p)       beta-folded bias
    o_ref: (tr, Wo, Cout_p)
    """
    x = x_ref[...].astype(jnp.float32)
    tr, _, wo, two_c = x.shape
    c = two_c // 2
    dot_dtype = w_ref.dtype

    def _norm(v):
        # Two-pass LayerNorm over channels (matches the reference numerically);
        # affine (gamma/beta) already folded into w_ref / b_ref.
        m = jnp.mean(v, axis=-1, keepdims=True)
        d = v - m
        var = jnp.mean(d * d, axis=-1, keepdims=True)
        return (d * lax.rsqrt(var + LN_EPS)).astype(dot_dtype)

    n0 = _norm(x[..., :c])   # pixels at even columns (kw = 0)
    n1 = _norm(x[..., c:])   # pixels at odd columns  (kw = 1)

    # Single fused contraction: columns ordered tap-major, tap k = 2*kh + kw.
    p = jnp.concatenate([n0[:, 0], n1[:, 0], n0[:, 1], n1[:, 1]], axis=-1)
    p = p.reshape(tr * wo, 4 * c)

    acc = jnp.dot(p, w_ref[...], preferred_element_type=jnp.float32)
    out = acc + b_ref[...]
    o_ref[...] = out.astype(o_ref.dtype).reshape(o_ref.shape)


def _pick_row_block(n_rows, wo, c, cout_p, x_itemsize, out_itemsize,
                    w_itemsize, target_m, vmem_budget_bytes):
    """Largest divisor `tr` of n_rows whose pipeline footprint fits the budget."""
    w_bytes = 2 * _round_up(4 * c, 8) * cout_p * w_itemsize + cout_p * 4
    in_row = 2 * _round_up(wo, 8) * _round_up(2 * c, 128) * x_itemsize
    out_row = _round_up(wo, 8) * cout_p * out_itemsize
    # double-buffered input + output, plus in-kernel f32/dot-dtype intermediates
    per_row = 2 * (in_row + out_row) + 2 * wo * _round_up(4 * c, 128) * 4
    budget_rows = max(1, (vmem_budget_bytes - w_bytes) // per_row)
    want = int(max(1, min(n_rows, budget_rows, max(1, target_m // wo))))
    tr = 1
    for cand in range(1, want + 1):
        if n_rows % cand == 0:
            tr = cand
    return tr


def downsample_pallas(x_nchw, conv_w, gamma, beta, *,
                      target_m=2048,
                      vmem_budget_bytes=32 * 1024 * 1024,
                      dot_dtype=jnp.bfloat16):
    """DownSample forward: NCHW in, NCHW out (same semantics as the torch module)."""
    B, C, H, W = x_nchw.shape
    Cout = conv_w.shape[0]
    assert conv_w.shape == (Cout, C, 2, 2)
    assert H % 2 == 0 and W % 2 == 0, "2x2 stride-2 conv expects even H, W"
    Ho, Wo = H // 2, W // 2
    Cout_p = _round_up(Cout, 128)                       # lane-dense output stores

    # ---- fold the LayerNorm affine into the conv parameters (once, in XLA) ----
    w_t = jnp.transpose(conv_w, (2, 3, 1, 0)).astype(jnp.float32)   # (kh,kw,C,Cout)
    bias = jnp.einsum("c,hwcn->n", beta.astype(jnp.float32), w_t)   # conv(beta) term
    w_g = (w_t * gamma.astype(jnp.float32)[None, None, :, None]).reshape(4 * C, Cout)
    if Cout_p != Cout:
        w_g = jnp.pad(w_g, ((0, 0), (0, Cout_p - Cout)))
        bias = jnp.pad(bias, (0, Cout_p - Cout))
    w_g = w_g.astype(dot_dtype)
    bias = bias.reshape(1, Cout_p)

    # ---- activations: single NCHW->NHWC relayout, then copy-free reshapes ----
    # TODO(synk): accept NHWC activations upstream to drop this one HBM pass too.
    x_nhwc = jnp.transpose(x_nchw, (0, 2, 3, 1))                    # (B, H, W, C)
    x_r = x_nhwc.reshape(B * Ho, 2, Wo, 2 * C)                      # free reshape

    n_rows = B * Ho
    tr = _pick_row_block(
        n_rows, Wo, C, Cout_p,
        x_nchw.dtype.itemsize, x_nchw.dtype.itemsize,
        jnp.dtype(dot_dtype).itemsize, target_m, vmem_budget_bytes)
    grid = n_rows // tr

    out = pl.pallas_call(
        _downsample_kernel,
        out_shape=jax.ShapeDtypeStruct((n_rows, Wo, Cout_p), x_nchw.dtype),
        grid_spec=pltpu.PrefetchScalarGridSpec(
            num_scalar_prefetch=0,
            grid=(grid,),
            in_specs=[
                pl.BlockSpec((tr, 2, Wo, 2 * C), lambda i: (i, 0, 0, 0)),
                pl.BlockSpec((4 * C, Cout_p), lambda i: (0, 0)),
                pl.BlockSpec((1, Cout_p), lambda i: (0, 0)),
            ],
            out_specs=pl.BlockSpec((tr, Wo, Cout_p), lambda i: (i, 0, 0)),
        ),
        compiler_params=pltpu.CompilerParams(
            dimension_semantics=("parallel",),          # shards grid across TCs on v7x
            vmem_limit_bytes=44 * 1024 * 1024),
    )(x_r, w_g, bias)

    out = out[:, :, :Cout].reshape(B, Ho, Wo, Cout)
    return jnp.transpose(out, (0, 3, 1, 2))             # back to NCHW


def downsample_reference(x_nchw, conv_w, gamma, beta):
    """Pure-JAX reference mirroring the PyTorch forward."""
    x = jnp.transpose(x_nchw, (0, 3, 2, 1))             # torch transpose(1, 3)
    mean = jnp.mean(x, axis=-1, keepdims=True)
    var = jnp.mean((x - mean) ** 2, axis=-1, keepdims=True)
    x = (x - mean) / jnp.sqrt(var + LN_EPS) * gamma + beta
    x = jnp.transpose(x, (0, 3, 2, 1))                  # back to NCHW
    return lax.conv_general_dilated(
        x, conv_w, window_strides=(2, 2), padding="VALID",
        dimension_numbers=("NCHW", "OIHW", "NCHW"))


if __name__ == "__main__":
    B, C, Cout, H, W = 2, 4, 8, 16, 16

    key = jax.random.PRNGKey(0)
    kx, kw, kg, kb = jax.random.split(key, 4)
    x = jax.random.normal(kx, (B, C, H, W), dtype=jnp.float32)
    conv_w = jax.random.normal(kw, (Cout, C, 2, 2), dtype=jnp.float32) * 0.1
    gamma = 1.0 + 0.1 * jax.random.normal(kg, (C,), dtype=jnp.float32)
    beta = 0.1 * jax.random.normal(kb, (C,), dtype=jnp.float32)

    ref = jax.block_until_ready(downsample_reference(x, conv_w, gamma, beta))

    # Exact-semantics check (f32 MXU path).
    out_f32 = jax.block_until_ready(
        downsample_pallas(x, conv_w, gamma, beta, dot_dtype=jnp.float32))
    assert out_f32.shape == (B, Cout, H // 2, W // 2), out_f32.shape
    assert jnp.allclose(out_f32, ref, atol=1e-4, rtol=1e-4), \
        float(jnp.max(jnp.abs(out_f32 - ref)))

    # Default fast path (bf16 MXU operands, f32 accumulation).
    out_bf16 = jax.block_until_ready(downsample_pallas(x, conv_w, gamma, beta))
    assert out_bf16.shape == (B, Cout, H // 2, W // 2), out_bf16.shape
    assert jnp.allclose(out_bf16, ref, atol=6e-2, rtol=5e-2), \
        float(jnp.max(jnp.abs(out_bf16 - ref)))

    print("KERNEL_OK")
</pallas_src>

<mosaic_0001>
module attributes {stable_mosaic.version = 11 : i64} {
  func.func @_downsample_kernel(%arg0: i32, %arg1: memref<16x2x8x8xf32, #tpu.memory_space<vmem>>, %arg2: memref<16x128xf32, #tpu.memory_space<vmem>>, %arg3: memref<1x128xf32, #tpu.memory_space<vmem>>, %arg4: memref<16x8x128xf32, #tpu.memory_space<vmem>>) attributes {dimension_semantics = [#tpu.dimension_semantics<parallel>], iteration_bounds = array<i64: 1>, scalar_prefetch = 0 : i64, scratch_operands = 0 : i64, tpu.core_type = #tpu.core_type<tc>, window_params = [{transform_indices = @transform_0, window_bounds = array<i64: 16, 2, 8, 8>}, {pipeline_mode = #tpu.pipeline_mode<synchronous>, transform_indices = @transform_1, window_bounds = array<i64: 16, 128>}, {pipeline_mode = #tpu.pipeline_mode<synchronous>, transform_indices = @transform_2, window_bounds = array<i64: 1, 128>}, {transform_indices = @transform_3, window_bounds = array<i64: 16, 8, 128>}]} {
    %c0 = arith.constant 0 : index
    %c0_0 = arith.constant 0 : index
    %c0_1 = arith.constant 0 : index
    %c0_2 = arith.constant 0 : index
    %0 = vector.load %arg1[%c0, %c0_0, %c0_1, %c0_2] : memref<16x2x8x8xf32, #tpu.memory_space<vmem>>, vector<16x2x8x8xf32>
    %1 = vector.extract_strided_slice %0 {offsets = [0, 0, 0, 0], sizes = [16, 2, 8, 4], strides = [1, 1, 1, 1]} : vector<16x2x8x8xf32> to vector<16x2x8x4xf32>
    %cst = arith.constant dense<0.000000e+00> : vector<16x2x8xf32>
    %2 = vector.multi_reduction <add>, %1, %cst [3] : vector<16x2x8x4xf32> to vector<16x2x8xf32>
    %3 = vector.shape_cast %2 : vector<16x2x8xf32> to vector<16x2x8x1xf32>
    %cst_3 = arith.constant 4.000000e+00 : f32
    %4 = vector.broadcast %cst_3 : f32 to vector<16x2x8x1xf32>
    %5 = arith.divf %3, %4 : vector<16x2x8x1xf32>
    %6 = vector.broadcast %5 : vector<16x2x8x1xf32> to vector<16x2x8x4xf32>
    %7 = arith.subf %1, %6 : vector<16x2x8x4xf32>
    %8 = arith.mulf %7, %7 : vector<16x2x8x4xf32>
    %cst_4 = arith.constant dense<0.000000e+00> : vector<16x2x8xf32>
    %9 = vector.multi_reduction <add>, %8, %cst_4 [3] : vector<16x2x8x4xf32> to vector<16x2x8xf32>
    %10 = vector.shape_cast %9 : vector<16x2x8xf32> to vector<16x2x8x1xf32>
    %cst_5 = arith.constant 4.000000e+00 : f32
    %11 = vector.broadcast %cst_5 : f32 to vector<16x2x8x1xf32>
    %12 = arith.divf %10, %11 : vector<16x2x8x1xf32>
    %cst_6 = arith.constant 9.99999974E-6 : f32
    %13 = vector.broadcast %cst_6 : f32 to vector<16x2x8x1xf32>
    %14 = arith.addf %12, %13 : vector<16x2x8x1xf32>
    %15 = math.rsqrt %14 : vector<16x2x8x1xf32>
    %16 = vector.broadcast %15 : vector<16x2x8x1xf32> to vector<16x2x8x4xf32>
    %17 = arith.mulf %7, %16 : vector<16x2x8x4xf32>
    %18 = vector.extract_strided_slice %0 {offsets = [0, 0, 0, 4], sizes = [16, 2, 8, 4], strides = [1, 1, 1, 1]} : vector<16x2x8x8xf32> to vector<16x2x8x4xf32>
    %cst_7 = arith.constant dense<0.000000e+00> : vector<16x2x8xf32>
    %19 = vector.multi_reduction <add>, %18, %cst_7 [3] : vector<16x2x8x4xf32> to vector<16x2x8xf32>
    %20 = vector.shape_cast %19 : vector<16x2x8xf32> to vector<16x2x8x1xf32>
    %cst_8 = arith.constant 4.000000e+00 : f32
    %21 = vector.broadcast %cst_8 : f32 to vector<16x2x8x1xf32>
    %22 = arith.divf %20, %21 : vector<16x2x8x1xf32>
    %23 = vector.broadcast %22 : vector<16x2x8x1xf32> to vector<16x2x8x4xf32>
    %24 = arith.subf %18, %23 : vector<16x2x8x4xf32>
    %25 = arith.mulf %24, %24 : vector<16x2x8x4xf32>
    %cst_9 = arith.constant dense<0.000000e+00> : vector<16x2x8xf32>
    %26 = vector.multi_reduction <add>, %25, %cst_9 [3] : vector<16x2x8x4xf32> to vector<16x2x8xf32>
    %27 = vector.shape_cast %26 : vector<16x2x8xf32> to vector<16x2x8x1xf32>
    %cst_10 = arith.constant 4.000000e+00 : f32
    %28 = vector.broadcast %cst_10 : f32 to vector<16x2x8x1xf32>
    %29 = arith.divf %27, %28 : vector<16x2x8x1xf32>
    %cst_11 = arith.constant 9.99999974E-6 : f32
    %30 = vector.broadcast %cst_11 : f32 to vector<16x2x8x1xf32>
    %31 = arith.addf %29, %30 : vector<16x2x8x1xf32>
    %32 = math.rsqrt %31 : vector<16x2x8x1xf32>
    %33 = vector.broadcast %32 : vector<16x2x8x1xf32> to vector<16x2x8x4xf32>
    %34 = arith.mulf %24, %33 : vector<16x2x8x4xf32>
    %35 = vector.extract_strided_slice %17 {offsets = [0, 0, 0, 0], sizes = [16, 1, 8, 4], strides = [1, 1, 1, 1]} : vector<16x2x8x4xf32> to vector<16x1x8x4xf32>
    %36 = vector.shape_cast %35 : vector<16x1x8x4xf32> to vector<16x8x4xf32>
    %37 = vector.extract_strided_slice %34 {offsets = [0, 0, 0, 0], sizes = [16, 1, 8, 4], strides = [1, 1, 1, 1]} : vector<16x2x8x4xf32> to vector<16x1x8x4xf32>
    %38 = vector.shape_cast %37 : vector<16x1x8x4xf32> to vector<16x8x4xf32>
    %39 = vector.extract_strided_slice %17 {offsets = [0, 1, 0, 0], sizes = [16, 1, 8, 4], strides = [1, 1, 1, 1]} : vector<16x2x8x4xf32> to vector<16x1x8x4xf32>
    %40 = vector.shape_cast %39 : vector<16x1x8x4xf32> to vector<16x8x4xf32>
    %41 = vector.extract_strided_slice %34 {offsets = [0, 1, 0, 0], sizes = [16, 1, 8, 4], strides = [1, 1, 1, 1]} : vector<16x2x8x4xf32> to vector<16x1x8x4xf32>
    %42 = vector.shape_cast %41 : vector<16x1x8x4xf32> to vector<16x8x4xf32>
    %43 = tpu.concatenate %36, %38, %40, %42 in 2 : vector<16x8x4xf32>, vector<16x8x4xf32>, vector<16x8x4xf32>, vector<16x8x4xf32> -> vector<16x8x16xf32>
    %44 = vector.shape_cast %43 : vector<16x8x16xf32> to vector<128x16xf32>
    %c0_12 = arith.constant 0 : index
    %c0_13 = arith.constant 0 : index
    %45 = vector.load %arg2[%c0_12, %c0_13] : memref<16x128xf32, #tpu.memory_space<vmem>>, vector<16x128xf32>
    %cst_14 = arith.constant dense<0.000000e+00> : vector<128x128xf32>
    %46 = tpu.matmul %44, %45, %cst_14 {dimension_numbers = #tpu.dot_dimension_numbers<[1], [0], [0], [1], [0, 0, 1, 1], [], []>} : vector<128x16xf32>, vector<16x128xf32>, vector<128x128xf32> -> vector<128x128xf32>
    %c0_15 = arith.constant 0 : index
    %c0_16 = arith.constant 0 : index
    %47 = vector.load %arg3[%c0_15, %c0_16] : memref<1x128xf32, #tpu.memory_space<vmem>>, vector<1x128xf32>
    %48 = vector.broadcast %47 : vector<1x128xf32> to vector<128x128xf32>
    %49 = arith.addf %46, %48 : vector<128x128xf32>
    %50 = vector.shape_cast %49 : vector<128x128xf32> to vector<16x8x128xf32>
    %c0_17 = arith.constant 0 : index
    %c0_18 = arith.constant 0 : index
    %c0_19 = arith.constant 0 : index
    %51 = vector.load %arg4[%c0_17, %c0_18, %c0_19] : memref<16x8x128xf32, #tpu.memory_space<vmem>>, vector<16x8x128xf32>
    tpu.vector_store %arg4[%c0_17, %c0_18, %c0_19], %50 {strides = array<i32>} : memref<16x8x128xf32, #tpu.memory_space<vmem>>, vector<16x8x128xf32>,
    return
  }
  func.func @transform_0(%arg0: i32) -> (i32, i32, i32, i32) {
    %c0_i32 = arith.constant 0 : i32
    %c0_i32_0 = arith.constant 0 : i32
    %c0_i32_1 = arith.constant 0 : i32
    %c0_i32_2 = arith.constant 0 : i32
    return %arg0, %c0_i32, %c0_i32_0, %c0_i32_1 : i32, i32, i32, i32
  }
  func.func @transform_1(%arg0: i32) -> (i32, i32) {
    %c0_i32 = arith.constant 0 : i32
    %c0_i32_0 = arith.constant 0 : i32
    %c0_i32_1 = arith.constant 0 : i32
    return %c0_i32, %c0_i32_0 : i32, i32
  }
  func.func @transform_2(%arg0: i32) -> (i32, i32) {
    %c0_i32 = arith.constant 0 : i32
    %c0_i32_0 = arith.constant 0 : i32
    %c0_i32_1 = arith.constant 0 : i32
    return %c0_i32, %c0_i32_0 : i32, i32
  }
  func.func @transform_3(%arg0: i32) -> (i32, i32, i32) {
    %c0_i32 = arith.constant 0 : i32
    %c0_i32_0 = arith.constant 0 : i32
    %c0_i32_1 = arith.constant 0 : i32
    return %arg0, %c0_i32, %c0_i32_0 : i32, i32, i32
  }
}

</mosaic_0001>

<llo_original>
// kernel: tpu_custom_call.1
$region0: #{tpu_custom_call.1}
  #allocation0 [shape = 'u32[]', space=smem, size = 0x4, offset = 0x4, fixed_abs, tag = 'smem constant byte address 0x4 - core index']
  #allocation1 [shape = 'u32[144,128]{1,0:T(1,128)}', space=vmem, size = 0x12000, scoped, tag = 'internal scratch']
  %s0 = inlined_call_operand.vmem [shape: f32[16,2,8,8], index: 0, kind: input, shape index: {}]
  %s1 = inlined_call_operand.vmem [shape: f32[16,128], index: 1, kind: input, shape index: {}]
  %s2 = inlined_call_operand.vmem [shape: f32[1,128], index: 2, kind: input, shape index: {}]
  %s3 = inlined_call_operand.hbm [shape: f32[16,8,128], index: 3, kind: output, shape index: {}]
  %s4 = sld [smem:[#allocation0]]
  $region22: #{tpu_custom_call.1} parent=0
    _
  %s6 = ssub.s32 1, %s4
  %s7 = scalar_select 0, %s6, %s4
  $region1: #{tpu_custom_call.1} parent=0
    #allocation2 [shape = 'u8[65536]{0}', space=vmem, size = 0x10000, scoped, tag = 'output window, operand 0, single buffered']
    #allocation3 [shape = 's32[1]{0}', space=sflag, size = 0x4, scoped, tag = 'scoped memory for tpu_custom_call.1']
    %8 = vsyncpa [#allocation3], 0
    // Predicated region
    $region2: #{tpu_custom_call.1} parent=1 // pred_check
      _
    $region3: #{tpu_custom_call.1} parent=1 // pred_check_branch
      %10 = sbr.rel (0) target = $region5
    $region4: #{tpu_custom_call.1} parent=1 // pred_region
      _
    $region5: #{tpu_custom_call.1} parent=1 // pred_fallthru
      _
    // Predicated region
    $region6: #{tpu_custom_call.1} parent=1 // pred_check
      _
    $region7: #{tpu_custom_call.1} parent=1 // pred_check_branch
      %12 = sbr.rel (0) target = $region9
    $region8: #{tpu_custom_call.1} parent=1 // pred_region
      _
    $region9: #{tpu_custom_call.1} parent=1 // pred_fallthru
      _
    // Predicated region
    $region10: #{tpu_custom_call.1} parent=1 // pred_check
      _
    $region11: #{tpu_custom_call.1} parent=1 // pred_check_branch
      %14 = sbr.rel (0) target = $region13
    $region12: #{tpu_custom_call.1} parent=1 // pred_region
      _
    $region13: #{tpu_custom_call.1} parent=1 // pred_fallthru
      _
    %v15 = vld [vmem:[%s0] sm:$0xff]
    %v16 = vld [vmem:[%s0 + $0x8] sm:$0xff]
    %v17 = vld [vmem:[%s0 + $0x10] sm:$0xff]
    %v18 = vld [vmem:[%s0 + $0x18] sm:$0xff]
    %v19 = vld [vmem:[%s0 + $0x20] sm:$0xff]
    %v20 = vld [vmem:[%s0 + $0x28] sm:$0xff]
    %v21 = vld [vmem:[%s0 + $0x30] sm:$0xff]
    %v22 = vld [vmem:[%s0 + $0x38] sm:$0xff]
    %v23 = vld [vmem:[%s0 + $0x40] sm:$0xff]
    %v24 = vld [vmem:[%s0 + $0x48] sm:$0xff]
    %v25 = vld [vmem:[%s0 + $0x50] sm:$0xff]
    %v26 = vld [vmem:[%s0 + $0x58] sm:$0xff]
    %v27 = vld [vmem:[%s0 + $0x60] sm:$0xff]
    %v28 = vld [vmem:[%s0 + $0x68] sm:$0xff]
    %v29 = vld [vmem:[%s0 + $0x70] sm:$0xff]
    %v30 = vld [vmem:[%s0 + $0x78] sm:$0xff]
    %v31 = vld [vmem:[%s0 + $0x80] sm:$0xff]
    %v32 = vld [vmem:[%s0 + $0x88] sm:$0xff]
    %v33 = vld [vmem:[%s0 + $0x90] sm:$0xff]
    %v34 = vld [vmem:[%s0 + $0x98] sm:$0xff]
    %v35 = vld [vmem:[%s0 + $0xa0] sm:$0xff]
    %v36 = vld [vmem:[%s0 + $0xa8] sm:$0xff]
    %v37 = vld [vmem:[%s0 + $0xb0] sm:$0xff]
    %v38 = vld [vmem:[%s0 + $0xb8] sm:$0xff]
    %v39 = vld [vmem:[%s0 + $0xc0] sm:$0xff]
    %v40 = vld [vmem:[%s0 + $0xc8] sm:$0xff]
    %v41 = vld [vmem:[%s0 + $0xd0] sm:$0xff]
    %v42 = vld [vmem:[%s0 + $0xd8] sm:$0xff]
    %v43 = vld [vmem:[%s0 + $0xe0] sm:$0xff]
    %v44 = vld [vmem:[%s0 + $0xe8] sm:$0xff]
    %v45 = vld [vmem:[%s0 + $0xf0] sm:$0xff]
    %v46 = vld [vmem:[%s0 + $0xf8] sm:$0xff]
    %vm47 = vcmask 31744
    %v48 = vsel %vm47, %v15, 0.0
    %49 = vadd.xlane.f32.xlu0 %v48
    %v50 = vpop.xlane.xlu0 %49
    %v51 = vsel %vm47, %v16, 0.0
    %52 = vadd.xlane.f32.xlu0 %v51
    %v53 = vpop.xlane.xlu0 %52
    %v54 = vsel %vm47, %v17, 0.0
    %55 = vadd.xlane.f32.xlu0 %v54
    %v56 = vpop.xlane.xlu0 %55
    %v57 = vsel %vm47, %v18, 0.0
    %58 = vadd.xlane.f32.xlu0 %v57
    %v59 = vpop.xlane.xlu0 %58
    %v60 = vsel %vm47, %v19, 0.0
    %61 = vadd.xlane.f32.xlu0 %v60
    %v62 = vpop.xlane.xlu0 %61
    %v63 = vsel %vm47, %v20, 0.0
    %64 = vadd.xlane.f32.xlu0 %v63
    %v65 = vpop.xlane.xlu0 %64
    %v66 = vsel %vm47, %v21, 0.0
    %67 = vadd.xlane.f32.xlu0 %v66
    %v68 = vpop.xlane.xlu0 %67
    %v69 = vsel %vm47, %v22, 0.0
    %70 = vadd.xlane.f32.xlu0 %v69
    %v71 = vpop.xlane.xlu0 %70
    %v72 = vsel %vm47, %v23, 0.0
    %73 = vadd.xlane.f32.xlu0 %v72
    %v74 = vpop.xlane.xlu0 %73
    %v75 = vsel %vm47, %v24, 0.0
    %76 = vadd.xlane.f32.xlu0 %v75
    %v77 = vpop.xlane.xlu0 %76
    %v78 = vsel %vm47, %v25, 0.0
    %79 = vadd.xlane.f32.xlu0 %v78
    %v80 = vpop.xlane.xlu0 %79
    %v81 = vsel %vm47, %v26, 0.0
    %82 = vadd.xlane.f32.xlu0 %v81
    %v83 = vpop.xlane.xlu0 %82
    %v84 = vsel %vm47, %v27, 0.0
    %85 = vadd.xlane.f32.xlu0 %v84
    %v86 = vpop.xlane.xlu0 %85
    %v87 = vsel %vm47, %v28, 0.0
    %88 = vadd.xlane.f32.xlu0 %v87
    %v89 = vpop.xlane.xlu0 %88
    %v90 = vsel %vm47, %v29, 0.0
    %91 = vadd.xlane.f32.xlu0 %v90
    %v92 = vpop.xlane.xlu0 %91
    %v93 = vsel %vm47, %v30, 0.0
    %94 = vadd.xlane.f32.xlu0 %v93
    %v95 = vpop.xlane.xlu0 %94
    %v96 = vsel %vm47, %v31, 0.0
    %97 = vadd.xlane.f32.xlu0 %v96
    %v98 = vpop.xlane.xlu0 %97
    %v99 = vsel %vm47, %v32, 0.0
    %100 = vadd.xlane.f32.xlu0 %v99
    %v101 = vpop.xlane.xlu0 %100
    %v102 = vsel %vm47, %v33, 0.0
    %103 = vadd.xlane.f32.xlu0 %v102
    %v104 = vpop.xlane.xlu0 %103
    %v105 = vsel %vm47, %v34, 0.0
    %106 = vadd.xlane.f32.xlu0 %v105
    %v107 = vpop.xlane.xlu0 %106
    %v108 = vsel %vm47, %v35, 0.0
    %109 = vadd.xlane.f32.xlu0 %v108
    %v110 = vpop.xlane.xlu0 %109
    %v111 = vsel %vm47, %v36, 0.0
    %112 = vadd.xlane.f32.xlu0 %v111
    %v113 = vpop.xlane.xlu0 %112
    %v114 = vsel %vm47, %v37, 0.0
    %115 = vadd.xlane.f32.xlu0 %v114
    %v116 = vpop.xlane.xlu0 %115
    %v117 = vsel %vm47, %v38, 0.0
    %118 = vadd.xlane.f32.xlu0 %v117
    %v119 = vpop.xlane.xlu0 %118
    %v120 = vsel %vm47, %v39, 0.0
    %121 = vadd.xlane.f32.xlu0 %v120
    %v122 = vpop.xlane.xlu0 %121
    %v123 = vsel %vm47, %v40, 0.0
    %124 = vadd.xlane.f32.xlu0 %v123
    %v125 = vpop.xlane.xlu0 %124
    %v126 = vsel %vm47, %v41, 0.0
    %127 = vadd.xlane.f32.xlu0 %v126
    %v128 = vpop.xlane.xlu0 %127
    %v129 = vsel %vm47, %v42, 0.0
    %130 = vadd.xlane.f32.xlu0 %v129
    %v131 = vpop.xlane.xlu0 %130
    %v132 = vsel %vm47, %v43, 0.0
    %133 = vadd.xlane.f32.xlu0 %v132
    %v134 = vpop.xlane.xlu0 %133
    %v135 = vsel %vm47, %v44, 0.0
    %136 = vadd.xlane.f32.xlu0 %v135
    %v137 = vpop.xlane.xlu0 %136
    %v138 = vsel %vm47, %v45, 0.0
    %139 = vadd.xlane.f32.xlu0 %v138
    %v140 = vpop.xlane.xlu0 %139
    %v141 = vsel %vm47, %v46, 0.0
    %142 = vadd.xlane.f32.xlu0 %v141
    %v143 = vpop.xlane.xlu0 %142
    %v144 = vrcp.pop 4.0
    %v145 = vmul.f32 %v50, %v144
    %v146 = vmul.f32 %v53, %v144
    %v147 = vmul.f32 %v56, %v144
    %v148 = vmul.f32 %v59, %v144
    %v149 = vmul.f32 %v62, %v144
    %v150 = vmul.f32 %v65, %v144
    %v151 = vmul.f32 %v68, %v144
    %v152 = vmul.f32 %v71, %v144
    %v153 = vmul.f32 %v74, %v144
    %v154 = vmul.f32 %v77, %v144
    %v155 = vmul.f32 %v80, %v144
    %v156 = vmul.f32 %v83, %v144
    %v157 = vmul.f32 %v86, %v144
    %v158 = vmul.f32 %v89, %v144
    %v159 = vmul.f32 %v92, %v144
    %v160 = vmul.f32 %v95, %v144
    %v161 = vmul.f32 %v98, %v144
    %v162 = vmul.f32 %v101, %v144
    %v163 = vmul.f32 %v104, %v144
    %v164 = vmul.f32 %v107, %v144
    %v165 = vmul.f32 %v110, %v144
    %v166 = vmul.f32 %v113, %v144
    %v167 = vmul.f32 %v116, %v144
    %v168 = vmul.f32 %v119, %v144
    %v169 = vmul.f32 %v122, %v144
    %v170 = vmul.f32 %v125, %v144
    %v171 = vmul.f32 %v128, %v144
    %v172 = vmul.f32 %v131, %v144
    %v173 = vmul.f32 %v134, %v144
    %v174 = vmul.f32 %v137, %v144
    %v175 = vmul.f32 %v140, %v144
    %v176 = vmul.f32 %v143, %v144
    %v177 = vsub.f32 %v15, %v145
    %v178 = vsub.f32 %v16, %v146
    %v179 = vsub.f32 %v17, %v147
    %v180 = vsub.f32 %v18, %v148
    %v181 = vsub.f32 %v19, %v149
    %v182 = vsub.f32 %v20, %v150
    %v183 = vsub.f32 %v21, %v151
    %v184 = vsub.f32 %v22, %v152
    %v185 = vsub.f32 %v23, %v153
    %v186 = vsub.f32 %v24, %v154
    %v187 = vsub.f32 %v25, %v155
    %v188 = vsub.f32 %v26, %v156
    %v189 = vsub.f32 %v27, %v157
    %v190 = vsub.f32 %v28, %v158
    %v191 = vsub.f32 %v29, %v159
    %v192 = vsub.f32 %v30, %v160
    %v193 = vsub.f32 %v31, %v161
    %v194 = vsub.f32 %v32, %v162
    %v195 = vsub.f32 %v33, %v163
    %v196 = vsub.f32 %v34, %v164
    %v197 = vsub.f32 %v35, %v165
    %v198 = vsub.f32 %v36, %v166
    %v199 = vsub.f32 %v37, %v167
    %v200 = vsub.f32 %v38, %v168
    %v201 = vsub.f32 %v39, %v169
    %v202 = vsub.f32 %v40, %v170
    %v203 = vsub.f32 %v41, %v171
    %v204 = vsub.f32 %v42, %v172
    %v205 = vsub.f32 %v43, %v173
    %v206 = vsub.f32 %v44, %v174
    %v207 = vsub.f32 %v45, %v175
    %v208 = vsub.f32 %v46, %v176
    %v209 = vmul.f32 %v177, %v177
    %v210 = vmul.f32 %v178, %v178
    %v211 = vmul.f32 %v179, %v179
    %v212 = vmul.f32 %v180, %v180
    %v213 = vmul.f32 %v181, %v181
    %v214 = vmul.f32 %v182, %v182
    %v215 = vmul.f32 %v183, %v183
    %v216 = vmul.f32 %v184, %v184
    %v217 = vmul.f32 %v185, %v185
    %v218 = vmul.f32 %v186, %v186
    %v219 = vmul.f32 %v187, %v187
    %v220 = vmul.f32 %v188, %v188
    %v221 = vmul.f32 %v189, %v189
    %v222 = vmul.f32 %v190, %v190
    %v223 = vmul.f32 %v191, %v191
    %v224 = vmul.f32 %v192, %v192
    %v225 = vmul.f32 %v193, %v193
    %v226 = vmul.f32 %v194, %v194
    %v227 = vmul.f32 %v195, %v195
    %v228 = vmul.f32 %v196, %v196
    %v229 = vmul.f32 %v197, %v197
    %v230 = vmul.f32 %v198, %v198
    %v231 = vmul.f32 %v199, %v199
    %v232 = vmul.f32 %v200, %v200
    %v233 = vmul.f32 %v201, %v201
    %v234 = vmul.f32 %v202, %v202
    %v235 = vmul.f32 %v203, %v203
    %v236 = vmul.f32 %v204, %v204
    %v237 = vmul.f32 %v205, %v205
    %v238 = vmul.f32 %v206, %v206
    %v239 = vmul.f32 %v207, %v207
    %v240 = vmul.f32 %v208, %v208
    %v241 = vsel %vm47, %v209, 0.0
    %242 = vadd.xlane.f32.xlu0 %v241
    %v243 = vpop.xlane.xlu0 %242
    %v244 = vsel %vm47, %v210, 0.0
    %245 = vadd.xlane.f32.xlu0 %v244
    %v246 = vpop.xlane.xlu0 %245
    %v247 = vsel %vm47, %v211, 0.0
    %248 = vadd.xlane.f32.xlu0 %v247
    %v249 = vpop.xlane.xlu0 %248
    %v250 = vsel %vm47, %v212, 0.0
    %251 = vadd.xlane.f32.xlu0 %v250
    %v252 = vpop.xlane.xlu0 %251
    %v253 = vsel %vm47, %v213, 0.0
    %254 = vadd.xlane.f32.xlu0 %v253
    %v255 = vpop.xlane.xlu0 %254
    %v256 = vsel %vm47, %v214, 0.0
    %257 = vadd.xlane.f32.xlu0 %v256
    %v258 = vpop.xlane.xlu0 %257
    %v259 = vsel %vm47, %v215, 0.0
    %260 = vadd.xlane.f32.xlu0 %v259
    %v261 = vpop.xlane.xlu0 %260
    %v262 = vsel %vm47, %v216, 0.0
    %263 = vadd.xlane.f32.xlu0 %v262
    %v264 = vpop.xlane.xlu0 %263
    %v265 = vsel %vm47, %v217, 0.0
    %266 = vadd.xlane.f32.xlu0 %v265
    %v267 = vpop.xlane.xlu0 %266
    %v268 = vsel %vm47, %v218, 0.0
    %269 = vadd.xlane.f32.xlu0 %v268
    %v270 = vpop.xlane.xlu0 %269
    %v271 = vsel %vm47, %v219, 0.0
    %272 = vadd.xlane.f32.xlu0 %v271
    %v273 = vpop.xlane.xlu0 %272
    %v274 = vsel %vm47, %v220, 0.0
    %275 = vadd.xlane.f32.xlu0 %v274
    %v276 = vpop.xlane.xlu0 %275
    %v277 = vsel %vm47, %v221, 0.0
    %278 = vadd.xlane.f32.xlu0 %v277
    %v279 = vpop.xlane.xlu0 %278
    %v280 = vsel %vm47, %v222, 0.0
    %281 = vadd.xlane.f32.xlu0 %v280
    %v282 = vpop.xlane.xlu0 %281
    %v283 = vsel %vm47, %v223, 0.0
    %284 = vadd.xlane.f32.xlu0 %v283
    %v285 = vpop.xlane.xlu0 %284
    %v286 = vsel %vm47, %v224, 0.0
    %287 = vadd.xlane.f32.xlu0 %v286
    %v288 = vpop.xlane.xlu0 %287
    %v289 = vsel %vm47, %v225, 0.0
    %290 = vadd.xlane.f32.xlu0 %v289
    %v291 = vpop.xlane.xlu0 %290
    %v292 = vsel %vm47, %v226, 0.0
    %293 = vadd.xlane.f32.xlu0 %v292
    %v294 = vpop.xlane.xlu0 %293
    %v295 = vsel %vm47, %v227, 0.0
    %296 = vadd.xlane.f32.xlu0 %v295
    %v297 = vpop.xlane.xlu0 %296
    %v298 = vsel %vm47, %v228, 0.0
    %299 = vadd.xlane.f32.xlu0 %v298
    %v300 = vpop.xlane.xlu0 %299
    %v301 = vsel %vm47, %v229, 0.0
    %302 = vadd.xlane.f32.xlu0 %v301
    %v303 = vpop.xlane.xlu0 %302
    %v304 = vsel %vm47, %v230, 0.0
    %305 = vadd.xlane.f32.xlu0 %v304
    %v306 = vpop.xlane.xlu0 %305
    %v307 = vsel %vm47, %v231, 0.0
    %308 = vadd.xlane.f32.xlu0 %v307
    %v309 = vpop.xlane.xlu0 %308
    %v310 = vsel %vm47, %v232, 0.0
    %311 = vadd.xlane.f32.xlu0 %v310
    %v312 = vpop.xlane.xlu0 %311
    %v313 = vsel %vm47, %v233, 0.0
    %314 = vadd.xlane.f32.xlu0 %v313
    %v315 = vpop.xlane.xlu0 %314
    %v316 = vsel %vm47, %v234, 0.0
    %317 = vadd.xlane.f32.xlu0 %v316
    %v318 = vpop.xlane.xlu0 %317
    %v319 = vsel %vm47, %v235, 0.0
    %320 = vadd.xlane.f32.xlu0 %v319
    %v321 = vpop.xlane.xlu0 %320
    %v322 = vsel %vm47, %v236, 0.0
    %323 = vadd.xlane.f32.xlu0 %v322
    %v324 = vpop.xlane.xlu0 %323
    %v325 = vsel %vm47, %v237, 0.0
    %326 = vadd.xlane.f32.xlu0 %v325
    %v327 = vpop.xlane.xlu0 %326
    %v328 = vsel %vm47, %v238, 0.0
    %329 = vadd.xlane.f32.xlu0 %v328
    %v330 = vpop.xlane.xlu0 %329
    %v331 = vsel %vm47, %v239, 0.0
    %332 = vadd.xlane.f32.xlu0 %v331
    %v333 = vpop.xlane.xlu0 %332
    %v334 = vsel %vm47, %v240, 0.0
    %335 = vadd.xlane.f32.xlu0 %v334
    %v336 = vpop.xlane.xlu0 %335
    %v337 = vmul.f32 %v243, %v144
    %v338 = vmul.f32 %v246, %v144
    %v339 = vmul.f32 %v249, %v144
    %v340 = vmul.f32 %v252, %v144
    %v341 = vmul.f32 %v255, %v144
    %v342 = vmul.f32 %v258, %v144
    %v343 = vmul.f32 %v261, %v144
    %v344 = vmul.f32 %v264, %v144
    %v345 = vmul.f32 %v267, %v144
    %v346 = vmul.f32 %v270, %v144
    %v347 = vmul.f32 %v273, %v144
    %v348 = vmul.f32 %v276, %v144
    %v349 = vmul.f32 %v279, %v144
    %v350 = vmul.f32 %v282, %v144
    %v351 = vmul.f32 %v285, %v144
    %v352 = vmul.f32 %v288, %v144
    %v353 = vmul.f32 %v291, %v144
    %v354 = vmul.f32 %v294, %v144
    %v355 = vmul.f32 %v297, %v144
    %v356 = vmul.f32 %v300, %v144
    %v357 = vmul.f32 %v303, %v144
    %v358 = vmul.f32 %v306, %v144
    %v359 = vmul.f32 %v309, %v144
    %v360 = vmul.f32 %v312, %v144
    %v361 = vmul.f32 %v315, %v144
    %v362 = vmul.f32 %v318, %v144
    %v363 = vmul.f32 %v321, %v144
    %v364 = vmul.f32 %v324, %v144
    %v365 = vmul.f32 %v327, %v144
    %v366 = vmul.f32 %v330, %v144
    %v367 = vmul.f32 %v333, %v144
    %v368 = vmul.f32 %v336, %v144
    %v369 = vadd.f32 %v337, 1e-05
    %v370 = vadd.f32 %v338, 1e-05
    %v371 = vadd.f32 %v339, 1e-05
    %v372 = vadd.f32 %v340, 1e-05
    %v373 = vadd.f32 %v341, 1e-05
    %v374 = vadd.f32 %v342, 1e-05
    %v375 = vadd.f32 %v343, 1e-05
    %v376 = vadd.f32 %v344, 1e-05
    %v377 = vadd.f32 %v345, 1e-05
    %v378 = vadd.f32 %v346, 1e-05
    %v379 = vadd.f32 %v347, 1e-05
    %v380 = vadd.f32 %v348, 1e-05
    %v381 = vadd.f32 %v349, 1e-05
    %v382 = vadd.f32 %v350, 1e-05
    %v383 = vadd.f32 %v351, 1e-05
    %v384 = vadd.f32 %v352, 1e-05
    %v385 = vadd.f32 %v353, 1e-05
    %v386 = vadd.f32 %v354, 1e-05
    %v387 = vadd.f32 %v355, 1e-05
    %v388 = vadd.f32 %v356, 1e-05
    %v389 = vadd.f32 %v357, 1e-05
    %v390 = vadd.f32 %v358, 1e-05
    %v391 = vadd.f32 %v359, 1e-05
    %v392 = vadd.f32 %v360, 1e-05
    %v393 = vadd.f32 %v361, 1e-05
    %v394 = vadd.f32 %v362, 1e-05
    %v395 = vadd.f32 %v363, 1e-05
    %v396 = vadd.f32 %v364, 1e-05
    %v397 = vadd.f32 %v365, 1e-05
    %v398 = vadd.f32 %v366, 1e-05
    %v399 = vadd.f32 %v367, 1e-05
    %v400 = vadd.f32 %v368, 1e-05
    %v401 = vrsqrt.pop %v369
    %v402 = vrsqrt.pop %v370
    %v403 = vrsqrt.pop %v371
    %v404 = vrsqrt.pop %v372
    %v405 = vrsqrt.pop %v373
    %v406 = vrsqrt.pop %v374
    %v407 = vrsqrt.pop %v375
    %v408 = vrsqrt.pop %v376
    %v409 = vrsqrt.pop %v377
    %v410 = vrsqrt.pop %v378
    %v411 = vrsqrt.pop %v379
    %v412 = vrsqrt.pop %v380
    %v413 = vrsqrt.pop %v381
    %v414 = vrsqrt.pop %v382
    %v415 = vrsqrt.pop %v383
    %v416 = vrsqrt.pop %v384
    %v417 = vrsqrt.pop %v385
    %v418 = vrsqrt.pop %v386
    %v419 = vrsqrt.pop %v387
    %v420 = vrsqrt.pop %v388
    %v421 = vrsqrt.pop %v389
    %v422 = vrsqrt.pop %v390
    %v423 = vrsqrt.pop %v391
    %v424 = vrsqrt.pop %v392
    %v425 = vrsqrt.pop %v393
    %v426 = vrsqrt.pop %v394
    %v427 = vrsqrt.pop %v395
    %v428 = vrsqrt.pop %v396
    %v429 = vrsqrt.pop %v397
    %v430 = vrsqrt.pop %v398
    %v431 = vrsqrt.pop %v399
    %v432 = vrsqrt.pop %v400
    %v433 = vmul.f32 %v177, %v401
    %v434 = vmul.f32 %v178, %v402
    %v435 = vmul.f32 %v179, %v403
    %v436 = vmul.f32 %v180, %v404
    %v437 = vmul.f32 %v181, %v405
    %v438 = vmul.f32 %v182, %v406
    %v439 = vmul.f32 %v183, %v407
    %v440 = vmul.f32 %v184, %v408
    %v441 = vmul.f32 %v185, %v409
    %v442 = vmul.f32 %v186, %v410
    %v443 = vmul.f32 %v187, %v411
    %v444 = vmul.f32 %v188, %v412
    %v445 = vmul.f32 %v189, %v413
    %v446 = vmul.f32 %v190, %v414
    %v447 = vmul.f32 %v191, %v415
    %v448 = vmul.f32 %v192, %v416
    %v449 = vmul.f32 %v193, %v417
    %v450 = vmul.f32 %v194, %v418
    %v451 = vmul.f32 %v195, %v419
    %v452 = vmul.f32 %v196, %v420
    %v453 = vmul.f32 %v197, %v421
    %v454 = vmul.f32 %v198, %v422
    %v455 = vmul.f32 %v199, %v423
    %v456 = vmul.f32 %v200, %v424
    %v457 = vmul.f32 %v201, %v425
    %v458 = vmul.f32 %v202, %v426
    %v459 = vmul.f32 %v203, %v427
    %v460 = vmul.f32 %v204, %v428
    %v461 = vmul.f32 %v205, %v429
    %v462 = vmul.f32 %v206, %v430
    %v463 = vmul.f32 %v207, %v431
    %v464 = vmul.f32 %v208, %v432
    %497 = vrot.lane.b32.xlu0 %v15, 124
    %v498 = vpop.permute.xlu0 %497
    %499 = vrot.lane.b32.xlu0 %v16, 124
    %v500 = vpop.permute.xlu0 %499
    %501 = vrot.lane.b32.xlu0 %v17, 124
    %v502 = vpop.permute.xlu0 %501
    %503 = vrot.lane.b32.xlu0 %v18, 124
    %v504 = vpop.permute.xlu0 %503
    %505 = vrot.lane.b32.xlu0 %v19, 124
    %v506 = vpop.permute.xlu0 %505
    %507 = vrot.lane.b32.xlu0 %v20, 124
    %v508 = vpop.permute.xlu0 %507
    %509 = vrot.lane.b32.xlu0 %v21, 124
    %v510 = vpop.permute.xlu0 %509
    %511 = vrot.lane.b32.xlu0 %v22, 124
    %v512 = vpop.permute.xlu0 %511
    %513 = vrot.lane.b32.xlu0 %v23, 124
    %v514 = vpop.permute.xlu0 %513
    %515 = vrot.lane.b32.xlu0 %v24, 124
    %v516 = vpop.permute.xlu0 %515
    %517 = vrot.lane.b32.xlu0 %v25, 124
    %v518 = vpop.permute.xlu0 %517
    %519 = vrot.lane.b32.xlu0 %v26, 124
    %v520 = vpop.permute.xlu0 %519
    %521 = vrot.lane.b32.xlu0 %v27, 124
    %v522 = vpop.permute.xlu0 %521
    %523 = vrot.lane.b32.xlu0 %v28, 124
    %v524 = vpop.permute.xlu0 %523
    %525 = vrot.lane.b32.xlu0 %v29, 124
    %v526 = vpop.permute.xlu0 %525
    %527 = vrot.lane.b32.xlu0 %v30, 124
    %v528 = vpop.permute.xlu0 %527
    %529 = vrot.lane.b32.xlu0 %v31, 124
    %v530 = vpop.permute.xlu0 %529
    %531 = vrot.lane.b32.xlu0 %v32, 124
    %v532 = vpop.permute.xlu0 %531
    %533 = vrot.lane.b32.xlu0 %v33, 124
    %v534 = vpop.permute.xlu0 %533
    %535 = vrot.lane.b32.xlu0 %v34, 124
    %v536 = vpop.permute.xlu0 %535
    %537 = vrot.lane.b32.xlu0 %v35, 124
    %v538 = vpop.permute.xlu0 %537
    %539 = vrot.lane.b32.xlu0 %v36, 124
    %v540 = vpop.permute.xlu0 %539
    %541 = vrot.lane.b32.xlu0 %v37, 124
    %v542 = vpop.permute.xlu0 %541
    %543 = vrot.lane.b32.xlu0 %v38, 124
    %v544 = vpop.permute.xlu0 %543
    %545 = vrot.lane.b32.xlu0 %v39, 124
    %v546 = vpop.permute.xlu0 %545
    %547 = vrot.lane.b32.xlu0 %v40, 124
    %v548 = vpop.permute.xlu0 %547
    %549 = vrot.lane.b32.xlu0 %v41, 124
    %v550 = vpop.permute.xlu0 %549
    %551 = vrot.lane.b32.xlu0 %v42, 124
    %v552 = vpop.permute.xlu0 %551
    %553 = vrot.lane.b32.xlu0 %v43, 124
    %v554 = vpop.permute.xlu0 %553
    %555 = vrot.lane.b32.xlu0 %v44, 124
    %v556 = vpop.permute.xlu0 %555
    %557 = vrot.lane.b32.xlu0 %v45, 124
    %v558 = vpop.permute.xlu0 %557
    %559 = vrot.lane.b32.xlu0 %v46, 124
    %v560 = vpop.permute.xlu0 %559
    %v593 = vsel %vm47, %v498, 0.0
    %594 = vadd.xlane.f32.xlu0 %v593
    %v595 = vpop.xlane.xlu0 %594
    %v596 = vsel %vm47, %v500, 0.0
    %597 = vadd.xlane.f32.xlu0 %v596
    %v598 = vpop.xlane.xlu0 %597
    %v599 = vsel %vm47, %v502, 0.0
    %600 = vadd.xlane.f32.xlu0 %v599
    %v601 = vpop.xlane.xlu0 %600
    %v602 = vsel %vm47, %v504, 0.0
    %603 = vadd.xlane.f32.xlu0 %v602
    %v604 = vpop.xlane.xlu0 %603
    %v605 = vsel %vm47, %v506, 0.0
    %606 = vadd.xlane.f32.xlu0 %v605
    %v607 = vpop.xlane.xlu0 %606
    %v608 = vsel %vm47, %v508, 0.0
    %609 = vadd.xlane.f32.xlu0 %v608
    %v610 = vpop.xlane.xlu0 %609
    %v611 = vsel %vm47, %v510, 0.0
    %612 = vadd.xlane.f32.xlu0 %v611
    %v613 = vpop.xlane.xlu0 %612
    %v614 = vsel %vm47, %v512, 0.0
    %615 = vadd.xlane.f32.xlu0 %v614
    %v616 = vpop.xlane.xlu0 %615
    %v617 = vsel %vm47, %v514, 0.0
    %618 = vadd.xlane.f32.xlu0 %v617
    %v619 = vpop.xlane.xlu0 %618
    %v620 = vsel %vm47, %v516, 0.0
    %621 = vadd.xlane.f32.xlu0 %v620
    %v622 = vpop.xlane.xlu0 %621
    %v623 = vsel %vm47, %v518, 0.0
    %624 = vadd.xlane.f32.xlu0 %v623
    %v625 = vpop.xlane.xlu0 %624
    %v626 = vsel %vm47, %v520, 0.0
    %627 = vadd.xlane.f32.xlu0 %v626
    %v628 = vpop.xlane.xlu0 %627
    %v629 = vsel %vm47, %v522, 0.0
    %630 = vadd.xlane.f32.xlu0 %v629
    %v631 = vpop.xlane.xlu0 %630
    %v632 = vsel %vm47, %v524, 0.0
    %633 = vadd.xlane.f32.xlu0 %v632
    %v634 = vpop.xlane.xlu0 %633
    %v635 = vsel %vm47, %v526, 0.0
    %636 = vadd.xlane.f32.xlu0 %v635
    %v637 = vpop.xlane.xlu0 %636
    %v638 = vsel %vm47, %v528, 0.0
    %639 = vadd.xlane.f32.xlu0 %v638
    %v640 = vpop.xlane.xlu0 %639
    %v641 = vsel %vm47, %v530, 0.0
    %642 = vadd.xlane.f32.xlu0 %v641
    %v643 = vpop.xlane.xlu0 %642
    %v644 = vsel %vm47, %v532, 0.0
    %645 = vadd.xlane.f32.xlu0 %v644
    %v646 = vpop.xlane.xlu0 %645
    %v647 = vsel %vm47, %v534, 0.0
    %648 = vadd.xlane.f32.xlu0 %v647
    %v649 = vpop.xlane.xlu0 %648
    %v650 = vsel %vm47, %v536, 0.0
    %651 = vadd.xlane.f32.xlu0 %v650
    %v652 = vpop.xlane.xlu0 %651
    %v653 = vsel %vm47, %v538, 0.0
    %654 = vadd.xlane.f32.xlu0 %v653
    %v655 = vpop.xlane.xlu0 %654
    %v656 = vsel %vm47, %v540, 0.0
    %657 = vadd.xlane.f32.xlu0 %v656
    %v658 = vpop.xlane.xlu0 %657
    %v659 = vsel %vm47, %v542, 0.0
    %660 = vadd.xlane.f32.xlu0 %v659
    %v661 = vpop.xlane.xlu0 %660
    %v662 = vsel %vm47, %v544, 0.0
    %663 = vadd.xlane.f32.xlu0 %v662
    %v664 = vpop.xlane.xlu0 %663
    %v665 = vsel %vm47, %v546, 0.0
    %666 = vadd.xlane.f32.xlu0 %v665
    %v667 = vpop.xlane.xlu0 %666
    %v668 = vsel %vm47, %v548, 0.0
    %669 = vadd.xlane.f32.xlu0 %v668
    %v670 = vpop.xlane.xlu0 %669
    %v671 = vsel %vm47, %v550, 0.0
    %672 = vadd.xlane.f32.xlu0 %v671
    %v673 = vpop.xlane.xlu0 %672
    %v674 = vsel %vm47, %v552, 0.0
    %675 = vadd.xlane.f32.xlu0 %v674
    %v676 = vpop.xlane.xlu0 %675
    %v677 = vsel %vm47, %v554, 0.0
    %678 = vadd.xlane.f32.xlu0 %v677
    %v679 = vpop.xlane.xlu0 %678
    %v680 = vsel %vm47, %v556, 0.0
    %681 = vadd.xlane.f32.xlu0 %v680
    %v682 = vpop.xlane.xlu0 %681
    %v683 = vsel %vm47, %v558, 0.0
    %684 = vadd.xlane.f32.xlu0 %v683
    %v685 = vpop.xlane.xlu0 %684
    %v686 = vsel %vm47, %v560, 0.0
    %687 = vadd.xlane.f32.xlu0 %v686
    %v688 = vpop.xlane.xlu0 %687
    %v689 = vmul.f32 %v595, %v144
    %v690 = vmul.f32 %v598, %v144
    %v691 = vmul.f32 %v601, %v144
    %v692 = vmul.f32 %v604, %v144
    %v693 = vmul.f32 %v607, %v144
    %v694 = vmul.f32 %v610, %v144
    %v695 = vmul.f32 %v613, %v144
    %v696 = vmul.f32 %v616, %v144
    %v697 = vmul.f32 %v619, %v144
    %v698 = vmul.f32 %v622, %v144
    %v699 = vmul.f32 %v625, %v144
    %v700 = vmul.f32 %v628, %v144
    %v701 = vmul.f32 %v631, %v144
    %v702 = vmul.f32 %v634, %v144
    %v703 = vmul.f32 %v637, %v144
    %v704 = vmul.f32 %v640, %v144
    %v705 = vmul.f32 %v643, %v144
    %v706 = vmul.f32 %v646, %v144
    %v707 = vmul.f32 %v649, %v144
    %v708 = vmul.f32 %v652, %v144
    %v709 = vmul.f32 %v655, %v144
    %v710 = vmul.f32 %v658, %v144
    %v711 = vmul.f32 %v661, %v144
    %v712 = vmul.f32 %v664, %v144
    %v713 = vmul.f32 %v667, %v144
    %v714 = vmul.f32 %v670, %v144
    %v715 = vmul.f32 %v673, %v144
    %v716 = vmul.f32 %v676, %v144
    %v717 = vmul.f32 %v679, %v144
    %v718 = vmul.f32 %v682, %v144
    %v719 = vmul.f32 %v685, %v144
    %v720 = vmul.f32 %v688, %v144
    %v721 = vsub.f32 %v15, %v689
    %v722 = vsub.f32 %v16, %v690
    %v723 = vsub.f32 %v17, %v691
    %v724 = vsub.f32 %v18, %v692
    %v725 = vsub.f32 %v19, %v693
    %v726 = vsub.f32 %v20, %v694
    %v727 = vsub.f32 %v21, %v695
    %v728 = vsub.f32 %v22, %v696
    %v729 = vsub.f32 %v23, %v697
    %v730 = vsub.f32 %v24, %v698
    %v731 = vsub.f32 %v25, %v699
    %v732 = vsub.f32 %v26, %v700
    %v733 = vsub.f32 %v27, %v701
    %v734 = vsub.f32 %v28, %v702
    %v735 = vsub.f32 %v29, %v703
    %v736 = vsub.f32 %v30, %v704
    %v737 = vsub.f32 %v31, %v705
    %v738 = vsub.f32 %v32, %v706
    %v739 = vsub.f32 %v33, %v707
    %v740 = vsub.f32 %v34, %v708
    %v741 = vsub.f32 %v35, %v709
    %v742 = vsub.f32 %v36, %v710
    %v743 = vsub.f32 %v37, %v711
    %v744 = vsub.f32 %v38, %v712
    %v745 = vsub.f32 %v39, %v713
    %v746 = vsub.f32 %v40, %v714
    %v747 = vsub.f32 %v41, %v715
    %v748 = vsub.f32 %v42, %v716
    %v749 = vsub.f32 %v43, %v717
    %v750 = vsub.f32 %v44, %v718
    %v751 = vsub.f32 %v45, %v719
    %v752 = vsub.f32 %v46, %v720
    %v753 = vmul.f32 %v721, %v721
    %v754 = vmul.f32 %v722, %v722
    %v755 = vmul.f32 %v723, %v723
    %v756 = vmul.f32 %v724, %v724
    %v757 = vmul.f32 %v725, %v725
    %v758 = vmul.f32 %v726, %v726
    %v759 = vmul.f32 %v727, %v727
    %v760 = vmul.f32 %v728, %v728
    %v761 = vmul.f32 %v729, %v729
    %v762 = vmul.f32 %v730, %v730
    %v763 = vmul.f32 %v731, %v731
    %v764 = vmul.f32 %v732, %v732
    %v765 = vmul.f32 %v733, %v733
    %v766 = vmul.f32 %v734, %v734
    %v767 = vmul.f32 %v735, %v735
    %v768 = vmul.f32 %v736, %v736
    %v769 = vmul.f32 %v737, %v737
    %v770 = vmul.f32 %v738, %v738
    %v771 = vmul.f32 %v739, %v739
    %v772 = vmul.f32 %v740, %v740
    %v773 = vmul.f32 %v741, %v741
    %v774 = vmul.f32 %v742, %v742
    %v775 = vmul.f32 %v743, %v743
    %v776 = vmul.f32 %v744, %v744
    %v777 = vmul.f32 %v745, %v745
    %v778 = vmul.f32 %v746, %v746
    %v779 = vmul.f32 %v747, %v747
    %v780 = vmul.f32 %v748, %v748
    %v781 = vmul.f32 %v749, %v749
    %v782 = vmul.f32 %v750, %v750
    %v783 = vmul.f32 %v751, %v751
    %v784 = vmul.f32 %v752, %v752
    %817 = vrot.lane.b32.xlu0 %v753, 124
    %v818 = vpop.permute.xlu0 %817
    %819 = vrot.lane.b32.xlu0 %v754, 124
    %v820 = vpop.permute.xlu0 %819
    %821 = vrot.lane.b32.xlu0 %v755, 124
    %v822 = vpop.permute.xlu0 %821
    %823 = vrot.lane.b32.xlu0 %v756, 124
    %v824 = vpop.permute.xlu0 %823
    %825 = vrot.lane.b32.xlu0 %v757, 124
    %v826 = vpop.permute.xlu0 %825
    %827 = vrot.lane.b32.xlu0 %v758, 124
    %v828 = vpop.permute.xlu0 %827
    %829 = vrot.lane.b32.xlu0 %v759, 124
    %v830 = vpop.permute.xlu0 %829
    %831 = vrot.lane.b32.xlu0 %v760, 124
    %v832 = vpop.permute.xlu0 %831
    %833 = vrot.lane.b32.xlu0 %v761, 124
    %v834 = vpop.permute.xlu0 %833
    %835 = vrot.lane.b32.xlu0 %v762, 124
    %v836 = vpop.permute.xlu0 %835
    %837 = vrot.lane.b32.xlu0 %v763, 124
    %v838 = vpop.permute.xlu0 %837
    %839 = vrot.lane.b32.xlu0 %v764, 124
    %v840 = vpop.permute.xlu0 %839
    %841 = vrot.lane.b32.xlu0 %v765, 124
    %v842 = vpop.permute.xlu0 %841
    %843 = vrot.lane.b32.xlu0 %v766, 124
    %v844 = vpop.permute.xlu0 %843
    %845 = vrot.lane.b32.xlu0 %v767, 124
    %v846 = vpop.permute.xlu0 %845
    %847 = vrot.lane.b32.xlu0 %v768, 124
    %v848 = vpop.permute.xlu0 %847
    %849 = vrot.lane.b32.xlu0 %v769, 124
    %v850 = vpop.permute.xlu0 %849
    %851 = vrot.lane.b32.xlu0 %v770, 124
    %v852 = vpop.permute.xlu0 %851
    %853 = vrot.lane.b32.xlu0 %v771, 124
    %v854 = vpop.permute.xlu0 %853
    %855 = vrot.lane.b32.xlu0 %v772, 124
    %v856 = vpop.permute.xlu0 %855
    %857 = vrot.lane.b32.xlu0 %v773, 124
    %v858 = vpop.permute.xlu0 %857
    %859 = vrot.lane.b32.xlu0 %v774, 124
    %v860 = vpop.permute.xlu0 %859
    %861 = vrot.lane.b32.xlu0 %v775, 124
    %v862 = vpop.permute.xlu0 %861
    %863 = vrot.lane.b32.xlu0 %v776, 124
    %v864 = vpop.permute.xlu0 %863
    %865 = vrot.lane.b32.xlu0 %v777, 124
    %v866 = vpop.permute.xlu0 %865
    %867 = vrot.lane.b32.xlu0 %v778, 124
    %v868 = vpop.permute.xlu0 %867
    %869 = vrot.lane.b32.xlu0 %v779, 124
    %v870 = vpop.permute.xlu0 %869
    %871 = vrot.lane.b32.xlu0 %v780, 124
    %v872 = vpop.permute.xlu0 %871
    %873 = vrot.lane.b32.xlu0 %v781, 124
    %v874 = vpop.permute.xlu0 %873
    %875 = vrot.lane.b32.xlu0 %v782, 124
    %v876 = vpop.permute.xlu0 %875
    %877 = vrot.lane.b32.xlu0 %v783, 124
    %v878 = vpop.permute.xlu0 %877
    %879 = vrot.lane.b32.xlu0 %v784, 124
    %v880 = vpop.permute.xlu0 %879
    %v913 = vsel %vm47, %v818, 0.0
    %914 = vadd.xlane.f32.xlu0 %v913
    %v915 = vpop.xlane.xlu0 %914
    %v916 = vsel %vm47, %v820, 0.0
    %917 = vadd.xlane.f32.xlu0 %v916
    %v918 = vpop.xlane.xlu0 %917
    %v919 = vsel %vm47, %v822, 0.0
    %920 = vadd.xlane.f32.xlu0 %v919
    %v921 = vpop.xlane.xlu0 %920
    %v922 = vsel %vm47, %v824, 0.0
    %923 = vadd.xlane.f32.xlu0 %v922
    %v924 = vpop.xlane.xlu0 %923
    %v925 = vsel %vm47, %v826, 0.0
    %926 = vadd.xlane.f32.xlu0 %v925
    %v927 = vpop.xlane.xlu0 %926
    %v928 = vsel %vm47, %v828, 0.0
    %929 = vadd.xlane.f32.xlu0 %v928
    %v930 = vpop.xlane.xlu0 %929
    %v931 = vsel %vm47, %v830, 0.0
    %932 = vadd.xlane.f32.xlu0 %v931
    %v933 = vpop.xlane.xlu0 %932
    %v934 = vsel %vm47, %v832, 0.0
    %935 = vadd.xlane.f32.xlu0 %v934
    %v936 = vpop.xlane.xlu0 %935
    %v937 = vsel %vm47, %v834, 0.0
    %938 = vadd.xlane.f32.xlu0 %v937
    %v939 = vpop.xlane.xlu0 %938
    %v940 = vsel %vm47, %v836, 0.0
    %941 = vadd.xlane.f32.xlu0 %v940
    %v942 = vpop.xlane.xlu0 %941
    %v943 = vsel %vm47, %v838, 0.0
    %944 = vadd.xlane.f32.xlu0 %v943
    %v945 = vpop.xlane.xlu0 %944
    %v946 = vsel %vm47, %v840, 0.0
    %947 = vadd.xlane.f32.xlu0 %v946
    %v948 = vpop.xlane.xlu0 %947
    %v949 = vsel %vm47, %v842, 0.0
    %950 = vadd.xlane.f32.xlu0 %v949
    %v951 = vpop.xlane.xlu0 %950
    %v952 = vsel %vm47, %v844, 0.0
    %953 = vadd.xlane.f32.xlu0 %v952
    %v954 = vpop.xlane.xlu0 %953
    %v955 = vsel %vm47, %v846, 0.0
    %956 = vadd.xlane.f32.xlu0 %v955
    %v957 = vpop.xlane.xlu0 %956
    %v958 = vsel %vm47, %v848, 0.0
    %959 = vadd.xlane.f32.xlu0 %v958
    %v960 = vpop.xlane.xlu0 %959
    %v961 = vsel %vm47, %v850, 0.0
    %962 = vadd.xlane.f32.xlu0 %v961
    %v963 = vpop.xlane.xlu0 %962
    %v964 = vsel %vm47, %v852, 0.0
    %965 = vadd.xlane.f32.xlu0 %v964
    %v966 = vpop.xlane.xlu0 %965
    %v967 = vsel %vm47, %v854, 0.0
    %968 = vadd.xlane.f32.xlu0 %v967
    %v969 = vpop.xlane.xlu0 %968
    %v970 = vsel %vm47, %v856, 0.0
    %971 = vadd.xlane.f32.xlu0 %v970
    %v972 = vpop.xlane.xlu0 %971
    %v973 = vsel %vm47, %v858, 0.0
    %974 = vadd.xlane.f32.xlu0 %v973
    %v975 = vpop.xlane.xlu0 %974
    %v976 = vsel %vm47, %v860, 0.0
    %977 = vadd.xlane.f32.xlu0 %v976
    %v978 = vpop.xlane.xlu0 %977
    %v979 = vsel %vm47, %v862, 0.0
    %980 = vadd.xlane.f32.xlu0 %v979
    %v981 = vpop.xlane.xlu0 %980
    %v982 = vsel %vm47, %v864, 0.0
    %983 = vadd.xlane.f32.xlu0 %v982
    %v984 = vpop.xlane.xlu0 %983
    %v985 = vsel %vm47, %v866, 0.0
    %986 = vadd.xlane.f32.xlu0 %v985
    %v987 = vpop.xlane.xlu0 %986
    %v988 = vsel %vm47, %v868, 0.0
    %989 = vadd.xlane.f32.xlu0 %v988
    %v990 = vpop.xlane.xlu0 %989
    %v991 = vsel %vm47, %v870, 0.0
    %992 = vadd.xlane.f32.xlu0 %v991
    %v993 = vpop.xlane.xlu0 %992
    %v994 = vsel %vm47, %v872, 0.0
    %995 = vadd.xlane.f32.xlu0 %v994
    %v996 = vpop.xlane.xlu0 %995
    %v997 = vsel %vm47, %v874, 0.0
    %998 = vadd.xlane.f32.xlu0 %v997
    %v999 = vpop.xlane.xlu0 %998
    %v1000 = vsel %vm47, %v876, 0.0
    %1001 = vadd.xlane.f32.xlu0 %v1000
    %v1002 = vpop.xlane.xlu0 %1001
    %v1003 = vsel %vm47, %v878, 0.0
    %1004 = vadd.xlane.f32.xlu0 %v1003
    %v1005 = vpop.xlane.xlu0 %1004
    %v1006 = vsel %vm47, %v880, 0.0
    %1007 = vadd.xlane.f32.xlu0 %v1006
    %v1008 = vpop.xlane.xlu0 %1007
    %v1009 = vmul.f32 %v915, %v144
    %v1010 = vmul.f32 %v918, %v144
    %v1011 = vmul.f32 %v921, %v144
    %v1012 = vmul.f32 %v924, %v144
    %v1013 = vmul.f32 %v927, %v144
    %v1014 = vmul.f32 %v930, %v144
    %v1015 = vmul.f32 %v933, %v144
    %v1016 = vmul.f32 %v936, %v144
    %v1017 = vmul.f32 %v939, %v144
    %v1018 = vmul.f32 %v942, %v144
    %v1019 = vmul.f32 %v945, %v144
    %v1020 = vmul.f32 %v948, %v144
    %v1021 = vmul.f32 %v951, %v144
    %v1022 = vmul.f32 %v954, %v144
    %v1023 = vmul.f32 %v957, %v144
    %v1024 = vmul.f32 %v960, %v144
    %v1025 = vmul.f32 %v963, %v144
    %v1026 = vmul.f32 %v966, %v144
    %v1027 = vmul.f32 %v969, %v144
    %v1028 = vmul.f32 %v972, %v144
    %v1029 = vmul.f32 %v975, %v144
    %v1030 = vmul.f32 %v978, %v144
    %v1031 = vmul.f32 %v981, %v144
    %v1032 = vmul.f32 %v984, %v144
    %v1033 = vmul.f32 %v987, %v144
    %v1034 = vmul.f32 %v990, %v144
    %v1035 = vmul.f32 %v993, %v144
    %v1036 = vmul.f32 %v996, %v144
    %v1037 = vmul.f32 %v999, %v144
    %v1038 = vmul.f32 %v1002, %v144
    %v1039 = vmul.f32 %v1005, %v144
    %v1040 = vmul.f32 %v1008, %v144
    %v1041 = vadd.f32 %v1009, 1e-05
    %v1042 = vadd.f32 %v1010, 1e-05
    %v1043 = vadd.f32 %v1011, 1e-05
    %v1044 = vadd.f32 %v1012, 1e-05
    %v1045 = vadd.f32 %v1013, 1e-05
    %v1046 = vadd.f32 %v1014, 1e-05
    %v1047 = vadd.f32 %v1015, 1e-05
    %v1048 = vadd.f32 %v1016, 1e-05
    %v1049 = vadd.f32 %v1017, 1e-05
    %v1050 = vadd.f32 %v1018, 1e-05
    %v1051 = vadd.f32 %v1019, 1e-05
    %v1052 = vadd.f32 %v1020, 1e-05
    %v1053 = vadd.f32 %v1021, 1e-05
    %v1054 = vadd.f32 %v1022, 1e-05
    %v1055 = vadd.f32 %v1023, 1e-05
    %v1056 = vadd.f32 %v1024, 1e-05
    %v1057 = vadd.f32 %v1025, 1e-05
    %v1058 = vadd.f32 %v1026, 1e-05
    %v1059 = vadd.f32 %v1027, 1e-05
    %v1060 = vadd.f32 %v1028, 1e-05
    %v1061 = vadd.f32 %v1029, 1e-05
    %v1062 = vadd.f32 %v1030, 1e-05
    %v1063 = vadd.f32 %v1031, 1e-05
    %v1064 = vadd.f32 %v1032, 1e-05
    %v1065 = vadd.f32 %v1033, 1e-05
    %v1066 = vadd.f32 %v1034, 1e-05
    %v1067 = vadd.f32 %v1035, 1e-05
    %v1068 = vadd.f32 %v1036, 1e-05
    %v1069 = vadd.f32 %v1037, 1e-05
    %v1070 = vadd.f32 %v1038, 1e-05
    %v1071 = vadd.f32 %v1039, 1e-05
    %v1072 = vadd.f32 %v1040, 1e-05
    %v1073 = vrsqrt.pop %v1041
    %v1074 = vrsqrt.pop %v1042
    %v1075 = vrsqrt.pop %v1043
    %v1076 = vrsqrt.pop %v1044
    %v1077 = vrsqrt.pop %v1045
    %v1078 = vrsqrt.pop %v1046
    %v1079 = vrsqrt.pop %v1047
    %v1080 = vrsqrt.pop %v1048
    %v1081 = vrsqrt.pop %v1049
    %v1082 = vrsqrt.pop %v1050
    %v1083 = vrsqrt.pop %v1051
    %v1084 = vrsqrt.pop %v1052
    %v1085 = vrsqrt.pop %v1053
    %v1086 = vrsqrt.pop %v1054
    %v1087 = vrsqrt.pop %v1055
    %v1088 = vrsqrt.pop %v1056
    %v1089 = vrsqrt.pop %v1057
    %v1090 = vrsqrt.pop %v1058
    %v1091 = vrsqrt.pop %v1059
    %v1092 = vrsqrt.pop %v1060
    %v1093 = vrsqrt.pop %v1061
    %v1094 = vrsqrt.pop %v1062
    %v1095 = vrsqrt.pop %v1063
    %v1096 = vrsqrt.pop %v1064
    %v1097 = vrsqrt.pop %v1065
    %v1098 = vrsqrt.pop %v1066
    %v1099 = vrsqrt.pop %v1067
    %v1100 = vrsqrt.pop %v1068
    %v1101 = vrsqrt.pop %v1069
    %v1102 = vrsqrt.pop %v1070
    %v1103 = vrsqrt.pop %v1071
    %v1104 = vrsqrt.pop %v1072
    %v1105 = vmul.f32 %v721, %v1073
    %v1106 = vmul.f32 %v722, %v1074
    %v1107 = vmul.f32 %v723, %v1075
    %v1108 = vmul.f32 %v724, %v1076
    %v1109 = vmul.f32 %v725, %v1077
    %v1110 = vmul.f32 %v726, %v1078
    %v1111 = vmul.f32 %v727, %v1079
    %v1112 = vmul.f32 %v728, %v1080
    %v1113 = vmul.f32 %v729, %v1081
    %v1114 = vmul.f32 %v730, %v1082
    %v1115 = vmul.f32 %v731, %v1083
    %v1116 = vmul.f32 %v732, %v1084
    %v1117 = vmul.f32 %v733, %v1085
    %v1118 = vmul.f32 %v734, %v1086
    %v1119 = vmul.f32 %v735, %v1087
    %v1120 = vmul.f32 %v736, %v1088
    %v1121 = vmul.f32 %v737, %v1089
    %v1122 = vmul.f32 %v738, %v1090
    %v1123 = vmul.f32 %v739, %v1091
    %v1124 = vmul.f32 %v740, %v1092
    %v1125 = vmul.f32 %v741, %v1093
    %v1126 = vmul.f32 %v742, %v1094
    %v1127 = vmul.f32 %v743, %v1095
    %v1128 = vmul.f32 %v744, %v1096
    %v1129 = vmul.f32 %v745, %v1097
    %v1130 = vmul.f32 %v746, %v1098
    %v1131 = vmul.f32 %v747, %v1099
    %v1132 = vmul.f32 %v748, %v1100
    %v1133 = vmul.f32 %v749, %v1101
    %v1134 = vmul.f32 %v750, %v1102
    %v1135 = vmul.f32 %v751, %v1103
    %v1136 = vmul.f32 %v752, %v1104
    %1153 = vrot.lane.b32.xlu0 %v434, 8
    %v1154 = vpop.permute.xlu0 %1153
    %1155 = vrot.lane.b32.xlu0 %v436, 8
    %v1156 = vpop.permute.xlu0 %1155
    %1157 = vrot.lane.b32.xlu0 %v438, 8
    %v1158 = vpop.permute.xlu0 %1157
    %1159 = vrot.lane.b32.xlu0 %v440, 8
    %v1160 = vpop.permute.xlu0 %1159
    %1161 = vrot.lane.b32.xlu0 %v442, 8
    %v1162 = vpop.permute.xlu0 %1161
    %1163 = vrot.lane.b32.xlu0 %v444, 8
    %v1164 = vpop.permute.xlu0 %1163
    %1165 = vrot.lane.b32.xlu0 %v446, 8
    %v1166 = vpop.permute.xlu0 %1165
    %1167 = vrot.lane.b32.xlu0 %v448, 8
    %v1168 = vpop.permute.xlu0 %1167
    %1169 = vrot.lane.b32.xlu0 %v450, 8
    %v1170 = vpop.permute.xlu0 %1169
    %1171 = vrot.lane.b32.xlu0 %v452, 8
    %v1172 = vpop.permute.xlu0 %1171
    %1173 = vrot.lane.b32.xlu0 %v454, 8
    %v1174 = vpop.permute.xlu0 %1173
    %1175 = vrot.lane.b32.xlu0 %v456, 8
    %v1176 = vpop.permute.xlu0 %1175
    %1177 = vrot.lane.b32.xlu0 %v458, 8
    %v1178 = vpop.permute.xlu0 %1177
    %1179 = vrot.lane.b32.xlu0 %v460, 8
    %v1180 = vpop.permute.xlu0 %1179
    %1181 = vrot.lane.b32.xlu0 %v462, 8
    %v1182 = vpop.permute.xlu0 %1181
    %1183 = vrot.lane.b32.xlu0 %v464, 8
    %v1184 = vpop.permute.xlu0 %1183
    %1217 = vrot.lane.b32.xlu0 %v1106, 8
    %v1218 = vpop.permute.xlu0 %1217
    %1219 = vrot.lane.b32.xlu0 %v1108, 8
    %v1220 = vpop.permute.xlu0 %1219
    %1221 = vrot.lane.b32.xlu0 %v1110, 8
    %v1222 = vpop.permute.xlu0 %1221
    %1223 = vrot.lane.b32.xlu0 %v1112, 8
    %v1224 = vpop.permute.xlu0 %1223
    %1225 = vrot.lane.b32.xlu0 %v1114, 8
    %v1226 = vpop.permute.xlu0 %1225
    %1227 = vrot.lane.b32.xlu0 %v1116, 8
    %v1228 = vpop.permute.xlu0 %1227
    %1229 = vrot.lane.b32.xlu0 %v1118, 8
    %v1230 = vpop.permute.xlu0 %1229
    %1231 = vrot.lane.b32.xlu0 %v1120, 8
    %v1232 = vpop.permute.xlu0 %1231
    %1233 = vrot.lane.b32.xlu0 %v1122, 8
    %v1234 = vpop.permute.xlu0 %1233
    %1235 = vrot.lane.b32.xlu0 %v1124, 8
    %v1236 = vpop.permute.xlu0 %1235
    %1237 = vrot.lane.b32.xlu0 %v1126, 8
    %v1238 = vpop.permute.xlu0 %1237
    %1239 = vrot.lane.b32.xlu0 %v1128, 8
    %v1240 = vpop.permute.xlu0 %1239
    %1241 = vrot.lane.b32.xlu0 %v1130, 8
    %v1242 = vpop.permute.xlu0 %1241
    %1243 = vrot.lane.b32.xlu0 %v1132, 8
    %v1244 = vpop.permute.xlu0 %1243
    %1245 = vrot.lane.b32.xlu0 %v1134, 8
    %v1246 = vpop.permute.xlu0 %1245
    %1247 = vrot.lane.b32.xlu0 %v1136, 8
    %v1248 = vpop.permute.xlu0 %1247
    %v1265 = vsel %vm47, %v433, %v1105
    %v1266 = vsel %vm47, %v435, %v1107
    %v1267 = vsel %vm47, %v437, %v1109
    %v1268 = vsel %vm47, %v439, %v1111
    %v1269 = vsel %vm47, %v441, %v1113
    %v1270 = vsel %vm47, %v443, %v1115
    %v1271 = vsel %vm47, %v445, %v1117
    %v1272 = vsel %vm47, %v447, %v1119
    %v1273 = vsel %vm47, %v449, %v1121
    %v1274 = vsel %vm47, %v451, %v1123
    %v1275 = vsel %vm47, %v453, %v1125
    %v1276 = vsel %vm47, %v455, %v1127
    %v1277 = vsel %vm47, %v457, %v1129
    %v1278 = vsel %vm47, %v459, %v1131
    %v1279 = vsel %vm47, %v461, %v1133
    %v1280 = vsel %vm47, %v463, %v1135
    %vm1281 = vcmask 64512
    %v1282 = vsel %vm1281, %v1265, %v1154
    %v1283 = vsel %vm1281, %v1266, %v1156
    %v1284 = vsel %vm1281, %v1267, %v1158
    %v1285 = vsel %vm1281, %v1268, %v1160
    %v1286 = vsel %vm1281, %v1269, %v1162
    %v1287 = vsel %vm1281, %v1270, %v1164
    %v1288 = vsel %vm1281, %v1271, %v1166
    %v1289 = vsel %vm1281, %v1272, %v1168
    %v1290 = vsel %vm1281, %v1273, %v1170
    %v1291 = vsel %vm1281, %v1274, %v1172
    %v1292 = vsel %vm1281, %v1275, %v1174
    %v1293 = vsel %vm1281, %v1276, %v1176
    %v1294 = vsel %vm1281, %v1277, %v1178
    %v1295 = vsel %vm1281, %v1278, %v1180
    %v1296 = vsel %vm1281, %v1279, %v1182
    %v1297 = vsel %vm1281, %v1280, %v1184
    %vm1298 = vcmask 97280
    %v1299 = vsel %vm1298, %v1282, %v1218
    %v1300 = vsel %vm1298, %v1283, %v1220
    %v1301 = vsel %vm1298, %v1284, %v1222
    %v1302 = vsel %vm1298, %v1285, %v1224
    %v1303 = vsel %vm1298, %v1286, %v1226
    %v1304 = vsel %vm1298, %v1287, %v1228
    %v1305 = vsel %vm1298, %v1288, %v1230
    %v1306 = vsel %vm1298, %v1289, %v1232
    %v1307 = vsel %vm1298, %v1290, %v1234
    %v1308 = vsel %vm1298, %v1291, %v1236
    %v1309 = vsel %vm1298, %v1292, %v1238
    %v1310 = vsel %vm1298, %v1293, %v1240
    %v1311 = vsel %vm1298, %v1294, %v1242
    %v1312 = vsel %vm1298, %v1295, %v1244
    %v1313 = vsel %vm1298, %v1296, %v1246
    %v1314 = vsel %vm1298, %v1297, %v1248
    %v1315 = vld [vmem:[%s1] sm:$0xff]
    %v1316 = vld [vmem:[%s1 + $0x8] sm:$0xff]
    %v1317 = vld [vmem:[%s2] sm:$0x1]
    %v1319 = vlaneseq
    %v1320 = vshrl.u32 %v1319, 7
    %v1321 = vsub.s32 0, %v1320
    %v1322 = vrot.slane %v1317, %v1321
    %vm1324 = vcmask 130048
    %v1326 = vsel %vm1324, %v1299, 0
    %v1329 = vsel %vm1324, %v1300, 0
    %v1332 = vsel %vm1324, %v1301, 0
    %v1335 = vsel %vm1324, %v1302, 0
    %v1338 = vsel %vm1324, %v1303, 0
    %v1341 = vsel %vm1324, %v1304, 0
    %v1344 = vsel %vm1324, %v1305, 0
    %v1347 = vsel %vm1324, %v1306, 0
    %v1350 = vsel %vm1324, %v1307, 0
    %v1353 = vsel %vm1324, %v1308, 0
    %v1356 = vsel %vm1324, %v1309, 0
    %v1359 = vsel %vm1324, %v1310, 0
    %v1362 = vsel %vm1324, %v1311, 0
    %v1365 = vsel %vm1324, %v1312, 0
    %v1368 = vsel %vm1324, %v1313, 0
    %v1371 = vsel %vm1324, %v1314, 0
    %1373 = vmatprep.subr.mxu0 0.0
    %1374 = vmatpush1.msra.mxu0 %v1315
    %1375 = vmatprep.subr.mxu0 0.0
    %1376 = vmatpush1.msra.mxu0 %v1316
    %1377 = vmatprep.subr.mxu0 0.0
    %1378 = vmatpush1.msra.mxu0 0.0
    %1379 = vmatprep.subr.mxu0 0.0
    %1380 = vmatpush1.msra.mxu0 0.0
    %1381 = vmatprep.subr.mxu0 0.0
    %1382 = vmatpush1.msra.mxu0 0.0
    %1383 = vmatprep.subr.mxu0 0.0
    %1384 = vmatpush1.msra.mxu0 0.0
    %1385 = vmatprep.subr.mxu0 0.0
    %1386 = vmatpush1.msra.mxu0 0.0
    %1387 = vmatprep.subr.mxu0 0.0
    %1388 = vmatpush1.msra.mxu0 0.0
    %1389 = vmatprep.subr.mxu0 0.0
    %1390 = vmatpush1.msra.mxu0 0.0
    %1391 = vmatprep.subr.mxu0 0.0
    %1392 = vmatpush1.msra.mxu0 0.0
    %1393 = vmatprep.subr.mxu0 0.0
    %1394 = vmatpush1.msra.mxu0 0.0
    %1395 = vmatprep.subr.mxu0 0.0
    %1396 = vmatpush1.msra.mxu0 0.0
    %1397 = vmatprep.subr.mxu0 0.0
    %1398 = vmatpush1.msra.mxu0 0.0
    %1399 = vmatprep.subr.mxu0 0.0
    %1400 = vmatpush1.msra.mxu0 0.0
    %1401 = vmatprep.subr.mxu0 0.0
    %1402 = vmatpush1.msra.mxu0 0.0
    %1403 = vmatprep.subr.mxu0 0.0
    %1404 = vmatpush1.msra.mxu0 0.0
    %1405 = vmatprep.subr.mxu0 0.0
    %1406 = vmatpush1.msra.mxu0 0.0
    %1407 = vmatprep.subr.mxu0 0.0
    %1408 = vmatpush1.msra.mxu0 0.0
    %1409 = vmatprep.subr.mxu0 0.0
    %1410 = vmatpush1.msra.mxu0 0.0
    %1411 = vmatprep.subr.mxu0 0.0
    %1412 = vmatpush1.msra.mxu0 0.0
    %1413 = vmatprep.subr.mxu0 0.0
    %1414 = vmatpush1.msra.mxu0 0.0
    %1415 = vmatprep.subr.mxu0 0.0
    %1416 = vmatpush1.msra.mxu0 0.0
    %1417 = vmatprep.subr.mxu0 0.0
    %1418 = vmatpush1.msra.mxu0 0.0
    %1419 = vmatprep.subr.mxu0 0.0
    %1420 = vmatpush1.msra.mxu0 0.0
    %1421 = vmatprep.subr.mxu0 0.0
    %1422 = vmatpush1.msra.mxu0 0.0
    %1423 = vmatprep.subr.mxu0 0.0
    %1424 = vmatpush1.msra.mxu0 0.0
    %1425 = vmatprep.subr.mxu0 0.0
    %1426 = vmatpush1.msra.mxu0 0.0
    %1427 = vmatprep.subr.mxu0 0.0
    %1428 = vmatpush1.msra.mxu0 0.0
    %1429 = vmatprep.subr.mxu0 0.0
    %1430 = vmatpush1.msra.mxu0 0.0
    %1431 = vmatprep.subr.mxu0 0.0
    %1432 = vmatpush1.msra.mxu0 0.0
    %1433 = vmatprep.subr.mxu0 0.0
    %1434 = vmatpush1.msra.mxu0 0.0
    %1435 = vmatprep.subr.mxu0 0.0
    %1436 = vmatpush1.msra.mxu0 0.0
    %1437 = vmatprep.mubr.f32.mxu0 0.0
    %1438 = vmatmul.mubr.f32.gmra.mrb[0].mxu0 %v1326
    %v1439 = vpop.f32.mrb[0].mxu0
    %v1440 = vadd.f32 %v1322, %v1439
    %v1441 = vpop.f32.mrb[0].mxu0
    %1442 = vmatprep.mubr.f32.mxu0 0.0
    %1443 = vmatmul.mubr.f32.gmra.mrb[0].mxu0 %v1329
    %v1444 = vpop.f32.mrb[0].mxu0
    %v1445 = vadd.f32 %v1322, %v1444
    %v1446 = vpop.f32.mrb[0].mxu0
    %1447 = vmatprep.mubr.f32.mxu0 0.0
    %1448 = vmatmul.mubr.f32.gmra.mrb[0].mxu0 %v1332
    %v1449 = vpop.f32.mrb[0].mxu0
    %v1450 = vadd.f32 %v1322, %v1449
    %v1451 = vpop.f32.mrb[0].mxu0
    %1452 = vmatprep.mubr.f32.mxu0 0.0
    %1453 = vmatmul.mubr.f32.gmra.mrb[0].mxu0 %v1335
    %v1454 = vpop.f32.mrb[0].mxu0
    %v1455 = vadd.f32 %v1322, %v1454
    %v1456 = vpop.f32.mrb[0].mxu0
    %1457 = vmatprep.mubr.f32.mxu0 0.0
    %1458 = vmatmul.mubr.f32.gmra.mrb[0].mxu0 %v1338
    %v1459 = vpop.f32.mrb[0].mxu0
    %v1460 = vadd.f32 %v1322, %v1459
    %v1461 = vpop.f32.mrb[0].mxu0
    %1462 = vmatprep.mubr.f32.mxu0 0.0
    %1463 = vmatmul.mubr.f32.gmra.mrb[0].mxu0 %v1341
    %v1464 = vpop.f32.mrb[0].mxu0
    %v1465 = vadd.f32 %v1322, %v1464
    %v1466 = vpop.f32.mrb[0].mxu0
    %1467 = vmatprep.mubr.f32.mxu0 0.0
    %1468 = vmatmul.mubr.f32.gmra.mrb[0].mxu0 %v1344
    %v1469 = vpop.f32.mrb[0].mxu0
    %v1470 = vadd.f32 %v1322, %v1469
    %v1471 = vpop.f32.mrb[0].mxu0
    %1472 = vmatprep.mubr.f32.mxu0 0.0
    %1473 = vmatmul.mubr.f32.gmra.mrb[0].mxu0 %v1347
    %v1474 = vpop.f32.mrb[0].mxu0
    %v1475 = vadd.f32 %v1322, %v1474
    %v1476 = vpop.f32.mrb[0].mxu0
    %1477 = vmatprep.mubr.f32.mxu0 0.0
    %1478 = vmatmul.mubr.f32.gmra.mrb[0].mxu0 %v1350
    %v1479 = vpop.f32.mrb[0].mxu0
    %v1480 = vadd.f32 %v1322, %v1479
    %v1481 = vpop.f32.mrb[0].mxu0
    %1482 = vmatprep.mubr.f32.mxu0 0.0
    %1483 = vmatmul.mubr.f32.gmra.mrb[0].mxu0 %v1353
    %v1484 = vpop.f32.mrb[0].mxu0
    %v1485 = vadd.f32 %v1322, %v1484
    %v1486 = vpop.f32.mrb[0].mxu0
    %1487 = vmatprep.mubr.f32.mxu0 0.0
    %1488 = vmatmul.mubr.f32.gmra.mrb[0].mxu0 %v1356
    %v1489 = vpop.f32.mrb[0].mxu0
    %v1490 = vadd.f32 %v1322, %v1489
    %v1491 = vpop.f32.mrb[0].mxu0
    %1492 = vmatprep.mubr.f32.mxu0 0.0
    %1493 = vmatmul.mubr.f32.gmra.mrb[0].mxu0 %v1359
    %v1494 = vpop.f32.mrb[0].mxu0
    %v1495 = vadd.f32 %v1322, %v1494
    %v1496 = vpop.f32.mrb[0].mxu0
    %1497 = vmatprep.mubr.f32.mxu0 0.0
    %1498 = vmatmul.mubr.f32.gmra.mrb[0].mxu0 %v1362
    %v1499 = vpop.f32.mrb[0].mxu0
    %v1500 = vadd.f32 %v1322, %v1499
    %v1501 = vpop.f32.mrb[0].mxu0
    %1502 = vmatprep.mubr.f32.mxu0 0.0
    %1503 = vmatmul.mubr.f32.gmra.mrb[0].mxu0 %v1365
    %v1504 = vpop.f32.mrb[0].mxu0
    %v1505 = vadd.f32 %v1322, %v1504
    %v1506 = vpop.f32.mrb[0].mxu0
    %1507 = vmatprep.mubr.f32.mxu0 0.0
    %1508 = vmatmul.mubr.f32.gmra.mrb[0].mxu0 %v1368
    %v1509 = vpop.f32.mrb[0].mxu0
    %v1510 = vadd.f32 %v1322, %v1509
    %v1511 = vpop.f32.mrb[0].mxu0
    %1512 = vmatprep.mubr.f32.mxu0 0.0
    %1513 = vmatmul.mubr.f32.gmra.mrb[0].mxu0 %v1371
    %v1514 = vpop.f32.mrb[0].mxu0
    %v1515 = vadd.f32 %v1322, %v1514
    %v1516 = vpop.f32.mrb[0].mxu0
    %1517 = vdwg.mxu0
    %1518 = vst [vmem:[#allocation2] sm:$0xff] %v1440
    %1519 = vst [vmem:[#allocation2 + $0x8] sm:$0xff] %v1445
    %1520 = vst [vmem:[#allocation2 + $0x10] sm:$0xff] %v1450
    %1521 = vst [vmem:[#allocation2 + $0x18] sm:$0xff] %v1455
    %1522 = vst [vmem:[#allocation2 + $0x20] sm:$0xff] %v1460
    %1523 = vst [vmem:[#allocation2 + $0x28] sm:$0xff] %v1465
    %1524 = vst [vmem:[#allocation2 + $0x30] sm:$0xff] %v1470
    %1525 = vst [vmem:[#allocation2 + $0x38] sm:$0xff] %v1475
    %1526 = vst [vmem:[#allocation2 + $0x40] sm:$0xff] %v1480
    %1527 = vst [vmem:[#allocation2 + $0x48] sm:$0xff] %v1485
    %1528 = vst [vmem:[#allocation2 + $0x50] sm:$0xff] %v1490
    %1529 = vst [vmem:[#allocation2 + $0x58] sm:$0xff] %v1495
    %1530 = vst [vmem:[#allocation2 + $0x60] sm:$0xff] %v1500
    %1531 = vst [vmem:[#allocation2 + $0x68] sm:$0xff] %v1505
    %1532 = vst [vmem:[#allocation2 + $0x70] sm:$0xff] %v1510
    %1533 = vst [vmem:[#allocation2 + $0x78] sm:$0xff] %v1515
    // Predicated region
    $region14: #{tpu_custom_call.1} parent=1 // pred_check
      _
    $region15: #{tpu_custom_call.1} parent=1 // pred_check_branch
      %1535 = sbr.rel (0) target = $region17
    $region16: #{tpu_custom_call.1} parent=1 // pred_region
      %s1537 = ssub.s32 2048, 2048
      %1538 = vsyncadd [#allocation3], %s1537
      %s1539 = sshll.u32 [#allocation2], 4
      %s1540 = int_to_ptr.vmem [resolvable:$true] %s1539
      %1545 = dma.vmem_to_hbm [thread:$0]  %s1540, 2048, %s3, [#allocation3], 128, 128, 8
    $region17: #{tpu_custom_call.1} parent=1 // pred_fallthru
      _
    // Predicated region
    $region18: #{tpu_custom_call.1} parent=1 // pred_check
      _
    $region19: #{tpu_custom_call.1} parent=1 // pred_check_branch
      %1547 = sbr.rel (0) target = $region21
    $region20: #{tpu_custom_call.1} parent=1 // pred_region
      %1548 = dma.done [#allocation3], 2048
    $region21: #{tpu_custom_call.1} parent=1 // pred_fallthru
      _
    %1549 = vsyncpa [#allocation3], 1

</llo_original>
